<compile_context>
chip_gen: v5e
topology: v5e:2x2
jax: 0.10.0
libtpu: 0.0.40
codegen_flags: <defaults>
</compile_context>

<pallas_src>
import jax
import jax.numpy as jnp
from jax.experimental import pallas as pl
from jax.experimental.pallas import tpu as pltpu


def diffpool_kernel(x_ref, w12_ref, b12_ref, w3_ref, b3_ref, adj_ref, out_ref):
    out_dim = out_ref.shape[-1]

    x = x_ref[0]                                           # (N, IN)

    # Fused fc1 + fc2 (single MXU contraction over the small K), then relu.
    hs = jnp.dot(x, w12_ref[...], preferred_element_type=jnp.float32) + b12_ref[...]
    hs = jnp.maximum(hs, 0.0)                              # (N, 2*OUT)
    h = hs[:, :out_dim]                                    # (N, OUT)
    s = hs[:, out_dim:]                                    # (N, OUT)

    # fc3 -> exp -> adjacency mask (unnormalized attention matrix).
    a = jnp.exp(jnp.dot(h, w3_ref[...], preferred_element_type=jnp.float32)
                + b3_ref[...])
    a = a * adj_ref[...].astype(jnp.float32)               # (N, N)

    # Row sums; normalization is deferred until after the matmul (algebraically
    # identical: scaling rows of the left operand commutes with the matmul).
    rowsum = jnp.sum(a, axis=1, keepdims=True)             # (N, 1)
    inv = pl.reciprocal(rowsum, approx=True)               # EUP vrcp
    inv = inv * (2.0 - rowsum * inv)                       # one Newton step -> ~f32 exact

    # out[i, :] = a[i, :] @ s  for all i  ==  a @ s, then per-row scale.
    out_ref[0] = jnp.dot(a, s, preferred_element_type=jnp.float32) * inv


def diffpool_forward(x, w1, b1, w2, b2, w3, b3, adj):
    """Batched DiffPool forward.

    x:   (B, N, IN)  float32   -- B independent graphs, shared weights/adjacency
    w1/w2: (IN, OUT) float32, b1/b2: (1, OUT) float32
    w3:  (OUT, OUT)  float32, b3: (1, OUT) float32
    adj: (N, N)      any dtype with exact 0/1 (bf16 recommended)
    returns: (B, N, OUT) float32
    """
    batch, num_nodes, in_features = x.shape
    out_features = w1.shape[1]

    # Fuse fc1/fc2 into one wide matmul.
    w12 = jnp.concatenate([w1, w2], axis=1)                # (IN, 2*OUT)
    b12 = jnp.concatenate([b1, b2], axis=1)                # (1, 2*OUT)

    return pl.pallas_call(
        diffpool_kernel,
        out_shape=jax.ShapeDtypeStruct((batch, num_nodes, out_features),
                                       jnp.float32),
        grid=(batch,),
        in_specs=[
            # Streams per grid step (double-buffered by the pipeline).
            pl.BlockSpec((1, num_nodes, in_features), lambda b: (b, 0, 0)),
            # Resident across the whole grid (index_map always block 0).
            pl.BlockSpec((in_features, 2 * out_features), lambda b: (0, 0)),
            pl.BlockSpec((1, 2 * out_features), lambda b: (0, 0)),
            pl.BlockSpec((out_features, out_features), lambda b: (0, 0)),
            pl.BlockSpec((1, out_features), lambda b: (0, 0)),
            pl.BlockSpec((num_nodes, num_nodes), lambda b: (0, 0)),
        ],
        out_specs=pl.BlockSpec((1, num_nodes, out_features),
                               lambda b: (b, 0, 0)),
        compiler_params=pltpu.CompilerParams(
            dimension_semantics=("parallel",)),
    )(x, w12, b12, w3, b3, adj)


def diffpool_reference(x, w1, b1, w2, b2, w3, b3, adj):
    h = jnp.maximum(x @ w1 + b1, 0.0)
    s = jnp.maximum(x @ w2 + b2, 0.0)
    a = jnp.exp(h @ w3 + b3) * adj
    a = a / jnp.sum(a, axis=-1, keepdims=True)
    return a @ s


if __name__ == "__main__":
    # Small but TPU-friendly shapes: num_nodes == out_features == 128 (lane-dense,
    # required anyway by the module's algebra), a small batch of graphs sharing
    # the module's fixed adjacency and weights.
    batch = 4
    num_nodes = 128
    out_features = 128
    in_features = 64

    key = jax.random.PRNGKey(0)
    k_x, k_w1, k_b1, k_w2, k_b2, k_w3, k_b3, k_adj = jax.random.split(key, 8)

    x = jax.random.normal(k_x, (batch, num_nodes, in_features), dtype=jnp.float32)

    # Parameters stored pre-transposed as (in, out); biases as (1, out).
    w1 = 0.05 * jax.random.normal(k_w1, (in_features, out_features), jnp.float32)
    b1 = 0.05 * jax.random.normal(k_b1, (1, out_features), jnp.float32)
    w2 = 0.05 * jax.random.normal(k_w2, (in_features, out_features), jnp.float32)
    b2 = 0.05 * jax.random.normal(k_b2, (1, out_features), jnp.float32)
    w3 = 0.05 * jax.random.normal(k_w3, (out_features, out_features), jnp.float32)
    b3 = 0.05 * jax.random.normal(k_b3, (1, out_features), jnp.float32)

    # Binary adjacency with self-loops (guarantees nonzero row sums, matching
    # the module's assumption).  Shipped as bf16 (exact for 0/1) to halve HBM
    # traffic; the kernel casts it back to f32 at the mask-multiply.
    adj_f32 = (jax.random.uniform(k_adj, (num_nodes, num_nodes)) > 0.5)
    adj_f32 = jnp.maximum(adj_f32.astype(jnp.float32),
                          jnp.eye(num_nodes, dtype=jnp.float32))
    adj_bf16 = adj_f32.astype(jnp.bfloat16)

    out = diffpool_forward(x, w1, b1, w2, b2, w3, b3, adj_bf16)
    out = jax.block_until_ready(out)

    ref = diffpool_reference(x, w1, b1, w2, b2, w3, b3, adj_f32)
    assert out.shape == (batch, num_nodes, out_features)
    assert jnp.allclose(out, ref, atol=2e-3, rtol=2e-3), "mismatch vs reference"

    print("KERNEL_OK")
</pallas_src>

<mosaic_0001>
module attributes {stable_mosaic.version = 11 : i64} {
  func.func @diffpool_kernel(%arg0: i32, %arg1: memref<1x128x64xf32, #tpu.memory_space<vmem>>, %arg2: memref<64x256xf32, #tpu.memory_space<vmem>>, %arg3: memref<1x256xf32, #tpu.memory_space<vmem>>, %arg4: memref<128x128xf32, #tpu.memory_space<vmem>>, %arg5: memref<1x128xf32, #tpu.memory_space<vmem>>, %arg6: memref<128x128xbf16, #tpu.memory_space<vmem>>, %arg7: memref<1x128x128xf32, #tpu.memory_space<vmem>>) attributes {dimension_semantics = [#tpu.dimension_semantics<parallel>], iteration_bounds = array<i64: 4>, scalar_prefetch = 0 : i64, scratch_operands = 0 : i64, tpu.core_type = #tpu.core_type<tc>, window_params = [{transform_indices = @transform_0, window_bounds = array<i64: 1, 128, 64>}, {pipeline_mode = #tpu.pipeline_mode<synchronous>, transform_indices = @transform_1, window_bounds = array<i64: 64, 256>}, {pipeline_mode = #tpu.pipeline_mode<synchronous>, transform_indices = @transform_2, window_bounds = array<i64: 1, 256>}, {pipeline_mode = #tpu.pipeline_mode<synchronous>, transform_indices = @transform_3, window_bounds = array<i64: 128, 128>}, {pipeline_mode = #tpu.pipeline_mode<synchronous>, transform_indices = @transform_4, window_bounds = array<i64: 1, 128>}, {pipeline_mode = #tpu.pipeline_mode<synchronous>, transform_indices = @transform_5, window_bounds = array<i64: 128, 128>}, {transform_indices = @transform_6, window_bounds = array<i64: 1, 128, 128>}]} {
    %c0 = arith.constant 0 : index
    %c0_0 = arith.constant 0 : index
    %c0_1 = arith.constant 0 : index
    %0 = vector.load %arg1[%c0, %c0_0, %c0_1] : memref<1x128x64xf32, #tpu.memory_space<vmem>>, vector<1x128x64xf32>
    %1 = vector.shape_cast %0 : vector<1x128x64xf32> to vector<128x64xf32>
    %c0_2 = arith.constant 0 : index
    %c0_3 = arith.constant 0 : index
    %2 = vector.load %arg2[%c0_2, %c0_3] : memref<64x256xf32, #tpu.memory_space<vmem>>, vector<64x256xf32>
    %cst = arith.constant dense<0.000000e+00> : vector<128x256xf32>
    %3 = tpu.matmul %1, %2, %cst {dimension_numbers = #tpu.dot_dimension_numbers<[1], [0], [0], [1], [0, 0, 1, 1], [], []>} : vector<128x64xf32>, vector<64x256xf32>, vector<128x256xf32> -> vector<128x256xf32>
    %c0_4 = arith.constant 0 : index
    %c0_5 = arith.constant 0 : index
    %4 = vector.load %arg3[%c0_4, %c0_5] : memref<1x256xf32, #tpu.memory_space<vmem>>, vector<1x256xf32>
    %5 = vector.broadcast %4 : vector<1x256xf32> to vector<128x256xf32>
    %6 = arith.addf %3, %5 : vector<128x256xf32>
    %cst_6 = arith.constant 0.000000e+00 : f32
    %7 = vector.broadcast %cst_6 : f32 to vector<128x256xf32>
    %8 = arith.maximumf %6, %7 : vector<128x256xf32>
    %9 = vector.extract_strided_slice %8 {offsets = [0, 0], sizes = [128, 128], strides = [1, 1]} : vector<128x256xf32> to vector<128x128xf32>
    %10 = vector.extract_strided_slice %8 {offsets = [0, 128], sizes = [128, 128], strides = [1, 1]} : vector<128x256xf32> to vector<128x128xf32>
    %c0_7 = arith.constant 0 : index
    %c0_8 = arith.constant 0 : index
    %11 = vector.load %arg4[%c0_7, %c0_8] : memref<128x128xf32, #tpu.memory_space<vmem>>, vector<128x128xf32>
    %cst_9 = arith.constant dense<0.000000e+00> : vector<128x128xf32>
    %12 = tpu.matmul %9, %11, %cst_9 {dimension_numbers = #tpu.dot_dimension_numbers<[1], [0], [0], [1], [0, 0, 1, 1], [], []>} : vector<128x128xf32>, vector<128x128xf32>, vector<128x128xf32> -> vector<128x128xf32>
    %c0_10 = arith.constant 0 : index
    %c0_11 = arith.constant 0 : index
    %13 = vector.load %arg5[%c0_10, %c0_11] : memref<1x128xf32, #tpu.memory_space<vmem>>, vector<1x128xf32>
    %14 = vector.broadcast %13 : vector<1x128xf32> to vector<128x128xf32>
    %15 = arith.addf %12, %14 : vector<128x128xf32>
    %16 = math.exp %15 : vector<128x128xf32>
    %c0_12 = arith.constant 0 : index
    %c0_13 = arith.constant 0 : index
    %17 = vector.load %arg6[%c0_12, %c0_13] : memref<128x128xbf16, #tpu.memory_space<vmem>>, vector<128x128xbf16>
    %18 = arith.extf %17 : vector<128x128xbf16> to vector<128x128xf32>
    %19 = arith.mulf %16, %18 : vector<128x128xf32>
    %cst_14 = arith.constant dense<0.000000e+00> : vector<128xf32>
    %20 = vector.multi_reduction <add>, %19, %cst_14 [1] : vector<128x128xf32> to vector<128xf32>
    %21 = vector.shape_cast %20 : vector<128xf32> to vector<128x1xf32>
    %22 = tpu.reciprocal %21 {approx = true} : vector<128x1xf32> -> vector<128x1xf32>
    %23 = arith.mulf %21, %22 : vector<128x1xf32>
    %cst_15 = arith.constant 2.000000e+00 : f32
    %24 = vector.broadcast %cst_15 : f32 to vector<128x1xf32>
    %25 = arith.subf %24, %23 : vector<128x1xf32>
    %26 = arith.mulf %22, %25 : vector<128x1xf32>
    %cst_16 = arith.constant dense<0.000000e+00> : vector<128x128xf32>
    %27 = tpu.matmul %19, %10, %cst_16 {dimension_numbers = #tpu.dot_dimension_numbers<[1], [0], [0], [1], [0, 0, 1, 1], [], []>} : vector<128x128xf32>, vector<128x128xf32>, vector<128x128xf32> -> vector<128x128xf32>
    %28 = vector.broadcast %26 : vector<128x1xf32> to vector<128x128xf32>
    %29 = arith.mulf %27, %28 : vector<128x128xf32>
    %c0_17 = arith.constant 0 : index
    %c0_18 = arith.constant 0 : index
    %c0_19 = arith.constant 0 : index
    %30 = vector.load %arg7[%c0_17, %c0_18, %c0_19] : memref<1x128x128xf32, #tpu.memory_space<vmem>>, vector<1x128x128xf32>
    %31 = vector.shape_cast %30 : vector<1x128x128xf32> to vector<128x128xf32>
    %32 = vector.shape_cast %29 : vector<128x128xf32> to vector<1x128x128xf32>
    tpu.vector_store %arg7[%c0_17, %c0_18, %c0_19], %32 {strides = array<i32>} : memref<1x128x128xf32, #tpu.memory_space<vmem>>, vector<1x128x128xf32>,
    return
  }
  func.func @transform_0(%arg0: i32) -> (i32, i32, i32) {
    %c0_i32 = arith.constant 0 : i32
    %c0_i32_0 = arith.constant 0 : i32
    %c0_i32_1 = arith.constant 0 : i32
    return %arg0, %c0_i32, %c0_i32_0 : i32, i32, i32
  }
  func.func @transform_1(%arg0: i32) -> (i32, i32) {
    %c0_i32 = arith.constant 0 : i32
    %c0_i32_0 = arith.constant 0 : i32
    %c0_i32_1 = arith.constant 0 : i32
    return %c0_i32, %c0_i32_0 : i32, i32
  }
  func.func @transform_2(%arg0: i32) -> (i32, i32) {
    %c0_i32 = arith.constant 0 : i32
    %c0_i32_0 = arith.constant 0 : i32
    %c0_i32_1 = arith.constant 0 : i32
    return %c0_i32, %c0_i32_0 : i32, i32
  }
  func.func @transform_3(%arg0: i32) -> (i32, i32) {
    %c0_i32 = arith.constant 0 : i32
    %c0_i32_0 = arith.constant 0 : i32
    %c0_i32_1 = arith.constant 0 : i32
    return %c0_i32, %c0_i32_0 : i32, i32
  }
  func.func @transform_4(%arg0: i32) -> (i32, i32) {
    %c0_i32 = arith.constant 0 : i32
    %c0_i32_0 = arith.constant 0 : i32
    %c0_i32_1 = arith.constant 0 : i32
    return %c0_i32, %c0_i32_0 : i32, i32
  }
  func.func @transform_5(%arg0: i32) -> (i32, i32) {
    %c0_i32 = arith.constant 0 : i32
    %c0_i32_0 = arith.constant 0 : i32
    %c0_i32_1 = arith.constant 0 : i32
    return %c0_i32, %c0_i32_0 : i32, i32
  }
  func.func @transform_6(%arg0: i32) -> (i32, i32, i32) {
    %c0_i32 = arith.constant 0 : i32
    %c0_i32_0 = arith.constant 0 : i32
    %c0_i32_1 = arith.constant 0 : i32
    return %arg0, %c0_i32, %c0_i32_0 : i32, i32, i32
  }
}

</mosaic_0001>

<llo_original>
// kernel: tpu_custom_call.1
$region0: #{tpu_custom_call.1}
  #allocation0 [shape = 'u32[]', space=smem, size = 0x4, offset = 0x4, fixed_abs, tag = 'smem constant byte address 0x4 - core index']
  #allocation1 [shape = 'u32[72,128]{1,0:T(1,128)}', space=vmem, size = 0x9000, scoped, tag = 'internal scratch']
  %s0 = inlined_call_operand.vmem [shape: f32[4,128,64], index: 0, kind: input, shape index: {}]
  %s1 = inlined_call_operand.vmem [shape: f32[64,256], index: 1, kind: input, shape index: {}]
  %s2 = inlined_call_operand.vmem [shape: f32[1,256], index: 2, kind: input, shape index: {}]
  %s3 = inlined_call_operand.vmem [shape: f32[128,128], index: 3, kind: input, shape index: {}]
  %s4 = inlined_call_operand.vmem [shape: f32[1,128], index: 4, kind: input, shape index: {}]
  %s5 = inlined_call_operand.vmem [shape: bf16[128,128], index: 5, kind: input, shape index: {}]
  %s6 = inlined_call_operand.hbm [shape: f32[4,128,128], index: 6, kind: output, shape index: {}]
  %s7 = sld [smem:[#allocation0]]
  $region57: #{tpu_custom_call.1} parent=0
    _
  %s9 = ssub.s32 1, %s7
  %s10 = scalar_select 0, %s9, %s7
  $region1: #{tpu_custom_call.1} parent=0
    #allocation2 [shape = 'u8[131072]{0}', space=vmem, size = 0x20000, scoped, tag = 'output window, operand 0']
    #allocation3 [shape = 's32[2]{0}', space=sflag, size = 0x8, scoped, tag = 'scoped memory for tpu_custom_call.1']
    %11 = vsyncpa [#allocation3], 0
    %s12 = scalar_lea.sflag [#allocation3], 1
    %13 = vsyncpa %s12, 0
    loop: start=0, step=1, limit=6
    $region2: #{tpu_custom_call.1} parent=1 // loop_pre_header
      _
    $region3: #{tpu_custom_call.1} parent=1 // loop_header
      %s15 = sphi 0, %s19
      %p16 = scmp.ge.s32.totalorder %s15, 6
      %s25 = sphi 0, %s27
      %s28 = sphi 0, %s25
      %s29 = sphi 0, %s28
      %s45 = sphi 0, %s29
      %s49 = sphi 0, %s49
      %s51 = sphi 0, %s49
      %s52 = sphi 0, %s51
      %s66 = sphi 0, %s52
      %s70 = sphi 0, %s70
      %s72 = sphi 0, %s70
      %s73 = sphi 0, %s72
      %s87 = sphi 0, %s73
      %s91 = sphi 0, %s91
      %s93 = sphi 0, %s91
      %s94 = sphi 0, %s93
      %s108 = sphi 0, %s94
      %s112 = sphi 0, %s112
      %s114 = sphi 0, %s112
      %s115 = sphi 0, %s114
      %s129 = sphi 0, %s115
      %s133 = sphi 0, %s133
      %s135 = sphi 0, %s133
      %s136 = sphi 0, %s135
      %s150 = sphi 0, %s136
      %s156 = sphi 0, %s158
      %s159 = sphi 0, %s156
      %s160 = sphi 0, %s159
      %s176 = sphi 0, %s160
    $region4: #{tpu_custom_call.1} parent=1 // loop_header_branch
      %18 = sbr.rel (%p16) target = $region8
    $region5: #{tpu_custom_call.1} parent=1 // loop_body
      %s20 = ssub.s32 %s15, 1
      %s21 = ssub.s32 %s15, 2
      %s22 = sadd.s32 %s15, 1
      %s23 = ssub.s32 %s15, %s22
      %p24 = scmp.eq.s32.totalorder %s23, 0
      %s26 = sadd.s32 %s25, 1
      %s27 = scalar_select %p24, %s25, %s26
      %p30 = pneg %p24
      %p31 = scmp.eq.s32.totalorder %s15, 3
      %p32 = por %p30, %p31
      %p33 = scmp.ne.s32.totalorder %s25, %s28
      %p34 = scmp.eq.s32.totalorder %s15, 0
      %p35 = por %p33, %p34
      %p36 = scmp.ne.s32.totalorder %s25, %s28
      %p37 = scmp.eq.s32.totalorder %s20, 3
      %p38 = por %p36, %p37
      %p39 = scmp.ne.s32.totalorder %s28, %s29
      %p40 = scmp.eq.s32.totalorder %s20, 0
      %p41 = por %p39, %p40
      %p42 = scmp.ne.s32.totalorder %s28, %s29
      %p43 = scmp.eq.s32.totalorder %s21, 3
      %p44 = por %p42, %p43
      %p46 = scmp.ne.s32.totalorder %s29, %s45
      %p47 = scmp.eq.s32.totalorder %s21, 0
      %p48 = por %p46, %p47
      %s50 = sadd.s32 %s49, 1
      %p53 = scmp.eq.s32.totalorder %s15, 3
      %p54 = scmp.ne.s32.totalorder %s49, %s51
      %p55 = scmp.eq.s32.totalorder %s15, 0
      %p56 = por %p54, %p55
      %p57 = scmp.ne.s32.totalorder %s49, %s51
      %p58 = scmp.eq.s32.totalorder %s20, 3
      %p59 = por %p57, %p58
      %p60 = scmp.ne.s32.totalorder %s51, %s52
      %p61 = scmp.eq.s32.totalorder %s20, 0
      %p62 = por %p60, %p61
      %p63 = scmp.ne.s32.totalorder %s51, %s52
      %p64 = scmp.eq.s32.totalorder %s21, 3
      %p65 = por %p63, %p64
      %p67 = scmp.ne.s32.totalorder %s52, %s66
      %p68 = scmp.eq.s32.totalorder %s21, 0
      %p69 = por %p67, %p68
      %s71 = sadd.s32 %s70, 1
      %p74 = scmp.eq.s32.totalorder %s15, 3
      %p75 = scmp.ne.s32.totalorder %s70, %s72
      %p76 = scmp.eq.s32.totalorder %s15, 0
      %p77 = por %p75, %p76
      %p78 = scmp.ne.s32.totalorder %s70, %s72
      %p79 = scmp.eq.s32.totalorder %s20, 3
      %p80 = por %p78, %p79
      %p81 = scmp.ne.s32.totalorder %s72, %s73
      %p82 = scmp.eq.s32.totalorder %s20, 0
      %p83 = por %p81, %p82
      %p84 = scmp.ne.s32.totalorder %s72, %s73
      %p85 = scmp.eq.s32.totalorder %s21, 3
      %p86 = por %p84, %p85
      %p88 = scmp.ne.s32.totalorder %s73, %s87
      %p89 = scmp.eq.s32.totalorder %s21, 0
      %p90 = por %p88, %p89
      %s92 = sadd.s32 %s91, 1
      %p95 = scmp.eq.s32.totalorder %s15, 3
      %p96 = scmp.ne.s32.totalorder %s91, %s93
      %p97 = scmp.eq.s32.totalorder %s15, 0
      %p98 = por %p96, %p97
      %p99 = scmp.ne.s32.totalorder %s91, %s93
      %p100 = scmp.eq.s32.totalorder %s20, 3
      %p101 = por %p99, %p100
      %p102 = scmp.ne.s32.totalorder %s93, %s94
      %p103 = scmp.eq.s32.totalorder %s20, 0
      %p104 = por %p102, %p103
      %p105 = scmp.ne.s32.totalorder %s93, %s94
      %p106 = scmp.eq.s32.totalorder %s21, 3
      %p107 = por %p105, %p106
      %p109 = scmp.ne.s32.totalorder %s94, %s108
      %p110 = scmp.eq.s32.totalorder %s21, 0
      %p111 = por %p109, %p110
      %s113 = sadd.s32 %s112, 1
      %p116 = scmp.eq.s32.totalorder %s15, 3
      %p117 = scmp.ne.s32.totalorder %s112, %s114
      %p118 = scmp.eq.s32.totalorder %s15, 0
      %p119 = por %p117, %p118
      %p120 = scmp.ne.s32.totalorder %s112, %s114
      %p121 = scmp.eq.s32.totalorder %s20, 3
      %p122 = por %p120, %p121
      %p123 = scmp.ne.s32.totalorder %s114, %s115
      %p124 = scmp.eq.s32.totalorder %s20, 0
      %p125 = por %p123, %p124
      %p126 = scmp.ne.s32.totalorder %s114, %s115
      %p127 = scmp.eq.s32.totalorder %s21, 3
      %p128 = por %p126, %p127
      %p130 = scmp.ne.s32.totalorder %s115, %s129
      %p131 = scmp.eq.s32.totalorder %s21, 0
      %p132 = por %p130, %p131
      %s134 = sadd.s32 %s133, 1
      %p137 = scmp.eq.s32.totalorder %s15, 3
      %p138 = scmp.ne.s32.totalorder %s133, %s135
      %p139 = scmp.eq.s32.totalorder %s15, 0
      %p140 = por %p138, %p139
      %p141 = scmp.ne.s32.totalorder %s133, %s135
      %p142 = scmp.eq.s32.totalorder %s20, 3
      %p143 = por %p141, %p142
      %p144 = scmp.ne.s32.totalorder %s135, %s136
      %p145 = scmp.eq.s32.totalorder %s20, 0
      %p146 = por %p144, %p145
      %p147 = scmp.ne.s32.totalorder %s135, %s136
      %p148 = scmp.eq.s32.totalorder %s21, 3
      %p149 = por %p147, %p148
      %p151 = scmp.ne.s32.totalorder %s136, %s150
      %p152 = scmp.eq.s32.totalorder %s21, 0
      %p153 = por %p151, %p152
      %s154 = ssub.s32 %s15, %s22
      %p155 = scmp.eq.s32.totalorder %s154, 0
      %s157 = sadd.s32 %s156, 1
      %s158 = scalar_select %p155, %s156, %s157
      %p161 = pneg %p155
      %p162 = scmp.eq.s32.totalorder %s15, 3
      %p163 = por %p161, %p162
      %p164 = scmp.ne.s32.totalorder %s156, %s159
      %p165 = scmp.eq.s32.totalorder %s15, 0
      %p166 = por %p164, %p165
      %p167 = scmp.ne.s32.totalorder %s156, %s159
      %p168 = scmp.eq.s32.totalorder %s20, 3
      %p169 = por %p167, %p168
      %p170 = scmp.ne.s32.totalorder %s159, %s160
      %p171 = scmp.eq.s32.totalorder %s20, 0
      %p172 = por %p170, %p171
      %p173 = scmp.ne.s32.totalorder %s159, %s160
      %p174 = scmp.eq.s32.totalorder %s21, 3
      %p175 = por %p173, %p174
      %p177 = scmp.ne.s32.totalorder %s160, %s176
      %p178 = scmp.eq.s32.totalorder %s21, 0
      %p179 = por %p177, %p178
      %p180 = scmp.le.s32.totalorder 1, %s15
      %p181 = scmp.lt.s32.totalorder %s15, 5
      %p182 = pnand %p180, %p181
      %p183 = pneg %p182
      // Predicated region
      $region9: #{tpu_custom_call.1} parent=5 // pred_check
        _
      $region10: #{tpu_custom_call.1} parent=5 // pred_check_branch
        %185 = sbr.rel (%p182) target = $region12
      $region11: #{tpu_custom_call.1} parent=5 // pred_region
        %s186 = ssub.s32 %s15, 1
        // Predicated region
        $region13: #{tpu_custom_call.1} parent=11 // pred_check
          %p187 = pneg %p62
        $region14: #{tpu_custom_call.1} parent=11 // pred_check_branch
          %189 = sbr.rel (%p187) target = $region16
        $region15: #{tpu_custom_call.1} parent=11 // pred_region
          _
        $region16: #{tpu_custom_call.1} parent=11 // pred_fallthru
          _
        // Predicated region
        $region17: #{tpu_custom_call.1} parent=11 // pred_check
          %p190 = pneg %p83
        $region18: #{tpu_custom_call.1} parent=11 // pred_check_branch
          %192 = sbr.rel (%p190) target = $region20
        $region19: #{tpu_custom_call.1} parent=11 // pred_region
          _
        $region20: #{tpu_custom_call.1} parent=11 // pred_fallthru
          _
        // Predicated region
        $region21: #{tpu_custom_call.1} parent=11 // pred_check
          %p193 = pneg %p104
        $region22: #{tpu_custom_call.1} parent=11 // pred_check_branch
          %195 = sbr.rel (%p193) target = $region24
        $region23: #{tpu_custom_call.1} parent=11 // pred_region
          _
        $region24: #{tpu_custom_call.1} parent=11 // pred_fallthru
          _
        // Predicated region
        $region25: #{tpu_custom_call.1} parent=11 // pred_check
          %p196 = pneg %p125
        $region26: #{tpu_custom_call.1} parent=11 // pred_check_branch
          %198 = sbr.rel (%p196) target = $region28
        $region27: #{tpu_custom_call.1} parent=11 // pred_region
          _
        $region28: #{tpu_custom_call.1} parent=11 // pred_fallthru
          _
        // Predicated region
        $region29: #{tpu_custom_call.1} parent=11 // pred_check
          %p199 = pneg %p146
        $region30: #{tpu_custom_call.1} parent=11 // pred_check_branch
          %201 = sbr.rel (%p199) target = $region32
        $region31: #{tpu_custom_call.1} parent=11 // pred_region
          _
        $region32: #{tpu_custom_call.1} parent=11 // pred_fallthru
          _
      $region12: #{tpu_custom_call.1} parent=5 // pred_fallthru
        _
      %p202 = scmp.lt.s32.totalorder %s15, 4
      // Predicated region
      $region33: #{tpu_custom_call.1} parent=5 // pred_check
        %p203 = pneg %p202
      $region34: #{tpu_custom_call.1} parent=5 // pred_check_branch
        %205 = sbr.rel (%p203) target = $region36
      $region35: #{tpu_custom_call.1} parent=5 // pred_region
        // Predicated region
        $region37: #{tpu_custom_call.1} parent=35 // pred_check
          %p206 = pneg %p35
        $region38: #{tpu_custom_call.1} parent=35 // pred_check_branch
          %208 = sbr.rel (%p206) target = $region40
        $region39: #{tpu_custom_call.1} parent=35 // pred_region
          %p209 = scmp.lt.s32.totalorder %s15, 3
          %s210 = scalar_select %p209, %s15, 3
          %s211 = smul.addr %s210, 16
          %s212 = smul.addr %s211, 8
          %s213 = scalar_lea.vmem %s0, %s212
        $region40: #{tpu_custom_call.1} parent=35 // pred_fallthru
          _
      $region36: #{tpu_custom_call.1} parent=5 // pred_fallthru
        _
      %p214 = scmp.le.s32.totalorder 1, %s15
      %p215 = scmp.lt.s32.totalorder %s15, 5
      %p216 = pnand %p214, %p215
      %p217 = pneg %p216
      // Predicated region
      $region41: #{tpu_custom_call.1} parent=5 // pred_check
        _
      $region42: #{tpu_custom_call.1} parent=5 // pred_check_branch
        %219 = sbr.rel (%p216) target = $region44
      $region43: #{tpu_custom_call.1} parent=5 // pred_region
        %s220 = ssub.s32 %s15, 1
        %p221 = scmp.lt.s32.totalorder %s20, 3
        %s222 = scalar_select %p221, %s20, 3
        %s223 = smul.addr %s222, 16
        %s224 = smul.addr %s223, 8
        %s225 = scalar_lea.vmem %s0, %s224
        %p226 = pneg %p41
        %p227 = pneg %p38
        %p228 = pneg %p62
        %p229 = pneg %p59
        %p230 = pneg %p83
        %p231 = pneg %p80
        %p232 = pneg %p104
        %p233 = pneg %p101
        %p234 = pneg %p125
        %p235 = pneg %p122
        %p236 = pneg %p146
        %p237 = pneg %p143
        %p238 = pneg %p172
        %p239 = pneg %p169
        %s240 = sand.u32 %s159, 1
        %s241 = scalar_lea.sflag [#allocation3], %s240
        %s242 = sand.u32 %s159, 1
        %s243 = smul.addr %s242, 128
        %s244 = scalar_lea.vmem [#allocation2], %s243
        %p245 = scmp.lt.s32.totalorder %s20, 3
        %s246 = scalar_select %p245, %s20, 3
        %s247 = smul.addr %s246, 16
        %s248 = smul.addr %s247, 8
        %s249 = scalar_lea.vmem %s0, %s248
        %v250 = vld [vmem:[%s249] sm:$0xff]
        %v251 = vld [vmem:[%s249 + $0x8] sm:$0xff]
        %v252 = vld [vmem:[%s249 + $0x10] sm:$0xff]
        %v253 = vld [vmem:[%s249 + $0x18] sm:$0xff]
        %v254 = vld [vmem:[%s249 + $0x20] sm:$0xff]
        %v255 = vld [vmem:[%s249 + $0x28] sm:$0xff]
        %v256 = vld [vmem:[%s249 + $0x30] sm:$0xff]
        %v257 = vld [vmem:[%s249 + $0x38] sm:$0xff]
        %v258 = vld [vmem:[%s249 + $0x40] sm:$0xff]
        %v259 = vld [vmem:[%s249 + $0x48] sm:$0xff]
        %v260 = vld [vmem:[%s249 + $0x50] sm:$0xff]
        %v261 = vld [vmem:[%s249 + $0x58] sm:$0xff]
        %v262 = vld [vmem:[%s249 + $0x60] sm:$0xff]
        %v263 = vld [vmem:[%s249 + $0x68] sm:$0xff]
        %v264 = vld [vmem:[%s249 + $0x70] sm:$0xff]
        %v265 = vld [vmem:[%s249 + $0x78] sm:$0xff]
        %v266 = vld [vmem:[%s1] sm:$0xff]
        %v267 = vld [vmem:[%s1 + $0x8] sm:$0xff]
        %v268 = vld [vmem:[%s1 + $0x10] sm:$0xff]
        %v269 = vld [vmem:[%s1 + $0x18] sm:$0xff]
        %v270 = vld [vmem:[%s1 + $0x20] sm:$0xff]
        %v271 = vld [vmem:[%s1 + $0x28] sm:$0xff]
        %v272 = vld [vmem:[%s1 + $0x30] sm:$0xff]
        %v273 = vld [vmem:[%s1 + $0x38] sm:$0xff]
        %v274 = vld [vmem:[%s1 + $0x40] sm:$0xff]
        %v275 = vld [vmem:[%s1 + $0x48] sm:$0xff]
        %v276 = vld [vmem:[%s1 + $0x50] sm:$0xff]
        %v277 = vld [vmem:[%s1 + $0x58] sm:$0xff]
        %v278 = vld [vmem:[%s1 + $0x60] sm:$0xff]
        %v279 = vld [vmem:[%s1 + $0x68] sm:$0xff]
        %v280 = vld [vmem:[%s1 + $0x70] sm:$0xff]
        %v281 = vld [vmem:[%s1 + $0x78] sm:$0xff]
        %v282 = vld [vmem:[%s2] sm:$0x3]
        %v284 = vperm.slane %v282, 0
        %v285 = vperm.slane %v282, 1
        %vm288 = vcmask 523264
        %v290 = vsel %vm288, %v250, 0
        %v293 = vsel %vm288, %v251, 0
        %v296 = vsel %vm288, %v252, 0
        %v299 = vsel %vm288, %v253, 0
        %v302 = vsel %vm288, %v254, 0
        %v305 = vsel %vm288, %v255, 0
        %v308 = vsel %vm288, %v256, 0
        %v311 = vsel %vm288, %v257, 0
        %v314 = vsel %vm288, %v258, 0
        %v317 = vsel %vm288, %v259, 0
        %v320 = vsel %vm288, %v260, 0
        %v323 = vsel %vm288, %v261, 0
        %v326 = vsel %vm288, %v262, 0
        %v329 = vsel %vm288, %v263, 0
        %v332 = vsel %vm288, %v264, 0
        %v335 = vsel %vm288, %v265, 0
        %337 = vmatpush.msra.mxu0 0.0
        %338 = vmatpush.msra.mxu0 0.0
        %339 = vmatpush.msra.mxu0 0.0
        %340 = vmatpush.msra.mxu0 0.0
        %341 = vmatpush.msra.mxu0 0.0
        %342 = vmatpush.msra.mxu0 0.0
        %343 = vmatpush.msra.mxu0 0.0
        %344 = vmatpush.msra.mxu0 0.0
        %345 = vmatpush.msra.mxu0 %v280
        %346 = vmatpush.msra.mxu0 %v278
        %347 = vmatpush.msra.mxu0 %v276
        %348 = vmatpush.msra.mxu0 %v274
        %349 = vmatpush.msra.mxu0 %v272
        %350 = vmatpush.msra.mxu0 %v270
        %351 = vmatpush.msra.mxu0 %v268
        %352 = vmatpush.msra.mxu0 %v266
        %353 = vmatmul.f32.gmra.mxu0 %v290
        %v354 = vpop.f32.mrf.mxu0
        %v355 = vadd.f32 %v284, %v354
        %356 = vmatmul.f32.gmra.mxu0 %v293
        %v357 = vpop.f32.mrf.mxu0
        %v358 = vadd.f32 %v284, %v357
        %359 = vmatmul.f32.gmra.mxu0 %v296
        %v360 = vpop.f32.mrf.mxu0
        %v361 = vadd.f32 %v284, %v360
        %362 = vmatmul.f32.gmra.mxu0 %v299
        %v363 = vpop.f32.mrf.mxu0
        %v364 = vadd.f32 %v284, %v363
        %365 = vmatmul.f32.gmra.mxu0 %v302
        %v366 = vpop.f32.mrf.mxu0
        %v367 = vadd.f32 %v284, %v366
        %368 = vmatmul.f32.gmra.mxu0 %v305
        %v369 = vpop.f32.mrf.mxu0
        %v370 = vadd.f32 %v284, %v369
        %371 = vmatmul.f32.gmra.mxu0 %v308
        %v372 = vpop.f32.mrf.mxu0
        %v373 = vadd.f32 %v284, %v372
        %374 = vmatmul.f32.gmra.mxu0 %v311
        %v375 = vpop.f32.mrf.mxu0
        %v376 = vadd.f32 %v284, %v375
        %377 = vmatmul.f32.gmra.mxu0 %v314
        %v378 = vpop.f32.mrf.mxu0
        %v379 = vadd.f32 %v284, %v378
        %380 = vmatmul.f32.gmra.mxu0 %v317
        %v381 = vpop.f32.mrf.mxu0
        %v382 = vadd.f32 %v284, %v381
        %383 = vmatmul.f32.gmra.mxu0 %v320
        %v384 = vpop.f32.mrf.mxu0
        %v385 = vadd.f32 %v284, %v384
        %386 = vmatmul.f32.gmra.mxu0 %v323
        %v387 = vpop.f32.mrf.mxu0
        %v388 = vadd.f32 %v284, %v387
        %389 = vmatmul.f32.gmra.mxu0 %v326
        %v390 = vpop.f32.mrf.mxu0
        %v391 = vadd.f32 %v284, %v390
        %392 = vmatmul.f32.gmra.mxu0 %v329
        %v393 = vpop.f32.mrf.mxu0
        %v394 = vadd.f32 %v284, %v393
        %395 = vmatmul.f32.gmra.mxu0 %v332
        %v396 = vpop.f32.mrf.mxu0
        %v397 = vadd.f32 %v284, %v396
        %398 = vmatmul.f32.gmra.mxu0 %v335
        %v399 = vpop.f32.mrf.mxu0
        %v400 = vadd.f32 %v284, %v399
        %401 = vdwg.mxu0
        %402 = vmatpush.msra.mxu0 0.0
        %403 = vmatpush.msra.mxu0 0.0
        %404 = vmatpush.msra.mxu0 0.0
        %405 = vmatpush.msra.mxu0 0.0
        %406 = vmatpush.msra.mxu0 0.0
        %407 = vmatpush.msra.mxu0 0.0
        %408 = vmatpush.msra.mxu0 0.0
        %409 = vmatpush.msra.mxu0 0.0
        %410 = vmatpush.msra.mxu0 %v281
        %411 = vmatpush.msra.mxu0 %v279
        %412 = vmatpush.msra.mxu0 %v277
        %413 = vmatpush.msra.mxu0 %v275
        %414 = vmatpush.msra.mxu0 %v273
        %415 = vmatpush.msra.mxu0 %v271
        %416 = vmatpush.msra.mxu0 %v269
        %417 = vmatpush.msra.mxu0 %v267
        %418 = vmatmul.f32.gmra.mxu0 %v290
        %v419 = vpop.f32.mrf.mxu0
        %v420 = vadd.f32 %v285, %v419
        %421 = vmatmul.f32.gmra.mxu0 %v293
        %v422 = vpop.f32.mrf.mxu0
        %v423 = vadd.f32 %v285, %v422
        %424 = vmatmul.f32.gmra.mxu0 %v296
        %v425 = vpop.f32.mrf.mxu0
        %v426 = vadd.f32 %v285, %v425
        %427 = vmatmul.f32.gmra.mxu0 %v299
        %v428 = vpop.f32.mrf.mxu0
        %v429 = vadd.f32 %v285, %v428
        %430 = vmatmul.f32.gmra.mxu0 %v302
        %v431 = vpop.f32.mrf.mxu0
        %v432 = vadd.f32 %v285, %v431
        %433 = vmatmul.f32.gmra.mxu0 %v305
        %v434 = vpop.f32.mrf.mxu0
        %v435 = vadd.f32 %v285, %v434
        %436 = vmatmul.f32.gmra.mxu0 %v308
        %v437 = vpop.f32.mrf.mxu0
        %v438 = vadd.f32 %v285, %v437
        %439 = vmatmul.f32.gmra.mxu0 %v311
        %v440 = vpop.f32.mrf.mxu0
        %v441 = vadd.f32 %v285, %v440
        %442 = vmatmul.f32.gmra.mxu0 %v314
        %v443 = vpop.f32.mrf.mxu0
        %v444 = vadd.f32 %v285, %v443
        %445 = vmatmul.f32.gmra.mxu0 %v317
        %v446 = vpop.f32.mrf.mxu0
        %v447 = vadd.f32 %v285, %v446
        %448 = vmatmul.f32.gmra.mxu0 %v320
        %v449 = vpop.f32.mrf.mxu0
        %v450 = vadd.f32 %v285, %v449
        %451 = vmatmul.f32.gmra.mxu0 %v323
        %v452 = vpop.f32.mrf.mxu0
        %v453 = vadd.f32 %v285, %v452
        %454 = vmatmul.f32.gmra.mxu0 %v326
        %v455 = vpop.f32.mrf.mxu0
        %v456 = vadd.f32 %v285, %v455
        %457 = vmatmul.f32.gmra.mxu0 %v329
        %v458 = vpop.f32.mrf.mxu0
        %v459 = vadd.f32 %v285, %v458
        %460 = vmatmul.f32.gmra.mxu0 %v332
        %v461 = vpop.f32.mrf.mxu0
        %v462 = vadd.f32 %v285, %v461
        %463 = vmatmul.f32.gmra.mxu0 %v335
        %v464 = vpop.f32.mrf.mxu0
        %v465 = vadd.f32 %v285, %v464
        %466 = vdwg.mxu0
        %v467 = vmax.f32 %v355, 0.0
        %v468 = vmax.f32 %v420, 0.0
        %v469 = vmax.f32 %v358, 0.0
        %v470 = vmax.f32 %v423, 0.0
        %v471 = vmax.f32 %v361, 0.0
        %v472 = vmax.f32 %v426, 0.0
        %v473 = vmax.f32 %v364, 0.0
        %v474 = vmax.f32 %v429, 0.0
        %v475 = vmax.f32 %v367, 0.0
        %v476 = vmax.f32 %v432, 0.0
        %v477 = vmax.f32 %v370, 0.0
        %v478 = vmax.f32 %v435, 0.0
        %v479 = vmax.f32 %v373, 0.0
        %v480 = vmax.f32 %v438, 0.0
        %v481 = vmax.f32 %v376, 0.0
        %v482 = vmax.f32 %v441, 0.0
        %v483 = vmax.f32 %v379, 0.0
        %v484 = vmax.f32 %v444, 0.0
        %v485 = vmax.f32 %v382, 0.0
        %v486 = vmax.f32 %v447, 0.0
        %v487 = vmax.f32 %v385, 0.0
        %v488 = vmax.f32 %v450, 0.0
        %v489 = vmax.f32 %v388, 0.0
        %v490 = vmax.f32 %v453, 0.0
        %v491 = vmax.f32 %v391, 0.0
        %v492 = vmax.f32 %v456, 0.0
        %v493 = vmax.f32 %v394, 0.0
        %v494 = vmax.f32 %v459, 0.0
        %v495 = vmax.f32 %v397, 0.0
        %v496 = vmax.f32 %v462, 0.0
        %v497 = vmax.f32 %v400, 0.0
        %v498 = vmax.f32 %v465, 0.0
        %v499 = vld [vmem:[%s3] sm:$0xff]
        %v500 = vld [vmem:[%s3 + $0x8] sm:$0xff]
        %v501 = vld [vmem:[%s3 + $0x10] sm:$0xff]
        %v502 = vld [vmem:[%s3 + $0x18] sm:$0xff]
        %v503 = vld [vmem:[%s3 + $0x20] sm:$0xff]
        %v504 = vld [vmem:[%s3 + $0x28] sm:$0xff]
        %v505 = vld [vmem:[%s3 + $0x30] sm:$0xff]
        %v506 = vld [vmem:[%s3 + $0x38] sm:$0xff]
        %v507 = vld [vmem:[%s3 + $0x40] sm:$0xff]
        %v508 = vld [vmem:[%s3 + $0x48] sm:$0xff]
        %v509 = vld [vmem:[%s3 + $0x50] sm:$0xff]
        %v510 = vld [vmem:[%s3 + $0x58] sm:$0xff]
        %v511 = vld [vmem:[%s3 + $0x60] sm:$0xff]
        %v512 = vld [vmem:[%s3 + $0x68] sm:$0xff]
        %v513 = vld [vmem:[%s3 + $0x70] sm:$0xff]
        %v514 = vld [vmem:[%s3 + $0x78] sm:$0xff]
        %v515 = vld [vmem:[%s4] sm:$0x1]
        %v517 = vperm.slane %v515, 0
        %519 = vmatpush.msra.mxu0 %v514
        %520 = vmatpush.msra.mxu0 %v513
        %521 = vmatpush.msra.mxu0 %v512
        %522 = vmatpush.msra.mxu0 %v511
        %523 = vmatpush.msra.mxu0 %v510
        %524 = vmatpush.msra.mxu0 %v509
        %525 = vmatpush.msra.mxu0 %v508
        %526 = vmatpush.msra.mxu0 %v507
        %527 = vmatpush.msra.mxu0 %v506
        %528 = vmatpush.msra.mxu0 %v505
        %529 = vmatpush.msra.mxu0 %v504
        %530 = vmatpush.msra.mxu0 %v503
        %531 = vmatpush.msra.mxu0 %v502
        %532 = vmatpush.msra.mxu0 %v501
        %533 = vmatpush.msra.mxu0 %v500
        %534 = vmatpush.msra.mxu0 %v499
        %535 = vmatmul.f32.gmra.mxu0 %v467
        %v536 = vpop.f32.mrf.mxu0
        %v537 = vadd.f32 %v517, %v536
        %538 = vmatmul.f32.gmra.mxu0 %v469
        %v539 = vpop.f32.mrf.mxu0
        %v540 = vadd.f32 %v517, %v539
        %541 = vmatmul.f32.gmra.mxu0 %v471
        %v542 = vpop.f32.mrf.mxu0
        %v543 = vadd.f32 %v517, %v542
        %544 = vmatmul.f32.gmra.mxu0 %v473
        %v545 = vpop.f32.mrf.mxu0
        %v546 = vadd.f32 %v517, %v545
        %547 = vmatmul.f32.gmra.mxu0 %v475
        %v548 = vpop.f32.mrf.mxu0
        %v549 = vadd.f32 %v517, %v548
        %550 = vmatmul.f32.gmra.mxu0 %v477
        %v551 = vpop.f32.mrf.mxu0
        %v552 = vadd.f32 %v517, %v551
        %553 = vmatmul.f32.gmra.mxu0 %v479
        %v554 = vpop.f32.mrf.mxu0
        %v555 = vadd.f32 %v517, %v554
        %556 = vmatmul.f32.gmra.mxu0 %v481
        %v557 = vpop.f32.mrf.mxu0
        %v558 = vadd.f32 %v517, %v557
        %559 = vmatmul.f32.gmra.mxu0 %v483
        %v560 = vpop.f32.mrf.mxu0
        %v561 = vadd.f32 %v517, %v560
        %562 = vmatmul.f32.gmra.mxu0 %v485
        %v563 = vpop.f32.mrf.mxu0
        %v564 = vadd.f32 %v517, %v563
        %565 = vmatmul.f32.gmra.mxu0 %v487
        %v566 = vpop.f32.mrf.mxu0
        %v567 = vadd.f32 %v517, %v566
        %568 = vmatmul.f32.gmra.mxu0 %v489
        %v569 = vpop.f32.mrf.mxu0
        %v570 = vadd.f32 %v517, %v569
        %571 = vmatmul.f32.gmra.mxu0 %v491
        %v572 = vpop.f32.mrf.mxu0
        %v573 = vadd.f32 %v517, %v572
        %574 = vmatmul.f32.gmra.mxu0 %v493
        %v575 = vpop.f32.mrf.mxu0
        %v576 = vadd.f32 %v517, %v575
        %577 = vmatmul.f32.gmra.mxu0 %v495
        %v578 = vpop.f32.mrf.mxu0
        %v579 = vadd.f32 %v517, %v578
        %580 = vmatmul.f32.gmra.mxu0 %v497
        %v581 = vpop.f32.mrf.mxu0
        %v582 = vadd.f32 %v517, %v581
        %583 = vdwg.mxu0
        %v584 = vmul.f32 %v537, 1.442695
        %v585 = vpow.pop %v584
        %v586 = vmul.f32 %v540, 1.442695
        %v587 = vpow.pop %v586
        %v588 = vmul.f32 %v543, 1.442695
        %v589 = vpow.pop %v588
        %v590 = vmul.f32 %v546, 1.442695
        %v591 = vpow.pop %v590
        %v592 = vmul.f32 %v549, 1.442695
        %v593 = vpow.pop %v592
        %v594 = vmul.f32 %v552, 1.442695
        %v595 = vpow.pop %v594
        %v596 = vmul.f32 %v555, 1.442695
        %v597 = vpow.pop %v596
        %v598 = vmul.f32 %v558, 1.442695
        %v599 = vpow.pop %v598
        %v600 = vmul.f32 %v561, 1.442695
        %v601 = vpow.pop %v600
        %v602 = vmul.f32 %v564, 1.442695
        %v603 = vpow.pop %v602
        %v604 = vmul.f32 %v567, 1.442695
        %v605 = vpow.pop %v604
        %v606 = vmul.f32 %v570, 1.442695
        %v607 = vpow.pop %v606
        %v608 = vmul.f32 %v573, 1.442695
        %v609 = vpow.pop %v608
        %v610 = vmul.f32 %v576, 1.442695
        %v611 = vpow.pop %v610
        %v612 = vmul.f32 %v579, 1.442695
        %v613 = vpow.pop %v612
        %v614 = vmul.f32 %v582, 1.442695
        %v615 = vpow.pop %v614
        %v616 = vld [vmem:[%s5] sm:$0xf]
        %v617 = vld [vmem:[%s5 + $0x4] sm:$0xf]
        %v618 = vld [vmem:[%s5 + $0x8] sm:$0xf]
        %v619 = vld [vmem:[%s5 + $0xc] sm:$0xf]
        %v620 = vld [vmem:[%s5 + $0x10] sm:$0xf]
        %v621 = vld [vmem:[%s5 + $0x14] sm:$0xf]
        %v622 = vld [vmem:[%s5 + $0x18] sm:$0xf]
        %v623 = vld [vmem:[%s5 + $0x1c] sm:$0xf]
        %v624 = vld [vmem:[%s5 + $0x20] sm:$0xf]
        %v625 = vld [vmem:[%s5 + $0x24] sm:$0xf]
        %v626 = vld [vmem:[%s5 + $0x28] sm:$0xf]
        %v627 = vld [vmem:[%s5 + $0x2c] sm:$0xf]
        %v628 = vld [vmem:[%s5 + $0x30] sm:$0xf]
        %v629 = vld [vmem:[%s5 + $0x34] sm:$0xf]
        %v630 = vld [vmem:[%s5 + $0x38] sm:$0xf]
        %v631 = vld [vmem:[%s5 + $0x3c] sm:$0xf]
        %v632 = vunpack.c.l.bf16 %v616
        %v633 = vunpack.c.l.bf16 %v617
        %v634 = vunpack.c.l.bf16 %v618
        %v635 = vunpack.c.l.bf16 %v619
        %v636 = vunpack.c.l.bf16 %v620
        %v637 = vunpack.c.l.bf16 %v621
        %v638 = vunpack.c.l.bf16 %v622
        %v639 = vunpack.c.l.bf16 %v623
        %v640 = vunpack.c.l.bf16 %v624
        %v641 = vunpack.c.l.bf16 %v625
        %v642 = vunpack.c.l.bf16 %v626
        %v643 = vunpack.c.l.bf16 %v627
        %v644 = vunpack.c.l.bf16 %v628
        %v645 = vunpack.c.l.bf16 %v629
        %v646 = vunpack.c.l.bf16 %v630
        %v647 = vunpack.c.l.bf16 %v631
        %v648 = vmul.f32 %v585, %v632
        %v649 = vmul.f32 %v587, %v633
        %v650 = vmul.f32 %v589, %v634
        %v651 = vmul.f32 %v591, %v635
        %v652 = vmul.f32 %v593, %v636
        %v653 = vmul.f32 %v595, %v637
        %v654 = vmul.f32 %v597, %v638
        %v655 = vmul.f32 %v599, %v639
        %v656 = vmul.f32 %v601, %v640
        %v657 = vmul.f32 %v603, %v641
        %v658 = vmul.f32 %v605, %v642
        %v659 = vmul.f32 %v607, %v643
        %v660 = vmul.f32 %v609, %v644
        %v661 = vmul.f32 %v611, %v645
        %v662 = vmul.f32 %v613, %v646
        %v663 = vmul.f32 %v615, %v647
        %664 = vadd.xlane.f32.xlu0 %v648
        %v665 = vpop.xlane.xlu0 %664
        %666 = vadd.xlane.f32.xlu0 %v649
        %v667 = vpop.xlane.xlu0 %666
        %668 = vadd.xlane.f32.xlu0 %v650
        %v669 = vpop.xlane.xlu0 %668
        %670 = vadd.xlane.f32.xlu0 %v651
        %v671 = vpop.xlane.xlu0 %670
        %672 = vadd.xlane.f32.xlu0 %v652
        %v673 = vpop.xlane.xlu0 %672
        %674 = vadd.xlane.f32.xlu0 %v653
        %v675 = vpop.xlane.xlu0 %674
        %676 = vadd.xlane.f32.xlu0 %v654
        %v677 = vpop.xlane.xlu0 %676
        %678 = vadd.xlane.f32.xlu0 %v655
        %v679 = vpop.xlane.xlu0 %678
        %680 = vadd.xlane.f32.xlu0 %v656
        %v681 = vpop.xlane.xlu0 %680
        %682 = vadd.xlane.f32.xlu0 %v657
        %v683 = vpop.xlane.xlu0 %682
        %684 = vadd.xlane.f32.xlu0 %v658
        %v685 = vpop.xlane.xlu0 %684
        %686 = vadd.xlane.f32.xlu0 %v659
        %v687 = vpop.xlane.xlu0 %686
        %688 = vadd.xlane.f32.xlu0 %v660
        %v689 = vpop.xlane.xlu0 %688
        %690 = vadd.xlane.f32.xlu0 %v661
        %v691 = vpop.xlane.xlu0 %690
        %692 = vadd.xlane.f32.xlu0 %v662
        %v693 = vpop.xlane.xlu0 %692
        %694 = vadd.xlane.f32.xlu0 %v663
        %v695 = vpop.xlane.xlu0 %694
        %v696 = vrcp.pop %v665
        %v697 = vrcp.pop %v667
        %v698 = vrcp.pop %v669
        %v699 = vrcp.pop %v671
        %v700 = vrcp.pop %v673
        %v701 = vrcp.pop %v675
        %v702 = vrcp.pop %v677
        %v703 = vrcp.pop %v679
        %v704 = vrcp.pop %v681
        %v705 = vrcp.pop %v683
        %v706 = vrcp.pop %v685
        %v707 = vrcp.pop %v687
        %v708 = vrcp.pop %v689
        %v709 = vrcp.pop %v691
        %v710 = vrcp.pop %v693
        %v711 = vrcp.pop %v695
        %v712 = vmul.f32 %v665, %v696
        %v713 = vmul.f32 %v667, %v697
        %v714 = vmul.f32 %v669, %v698
        %v715 = vmul.f32 %v671, %v699
        %v716 = vmul.f32 %v673, %v700
        %v717 = vmul.f32 %v675, %v701
        %v718 = vmul.f32 %v677, %v702
        %v719 = vmul.f32 %v679, %v703
        %v720 = vmul.f32 %v681, %v704
        %v721 = vmul.f32 %v683, %v705
        %v722 = vmul.f32 %v685, %v706
        %v723 = vmul.f32 %v687, %v707
        %v724 = vmul.f32 %v689, %v708
        %v725 = vmul.f32 %v691, %v709
        %v726 = vmul.f32 %v693, %v710
        %v727 = vmul.f32 %v695, %v711
        %v728 = vsub.f32 2.0, %v712
        %v729 = vsub.f32 2.0, %v713
        %v730 = vsub.f32 2.0, %v714
        %v731 = vsub.f32 2.0, %v715
        %v732 = vsub.f32 2.0, %v716
        %v733 = vsub.f32 2.0, %v717
        %v734 = vsub.f32 2.0, %v718
        %v735 = vsub.f32 2.0, %v719
        %v736 = vsub.f32 2.0, %v720
        %v737 = vsub.f32 2.0, %v721
        %v738 = vsub.f32 2.0, %v722
        %v739 = vsub.f32 2.0, %v723
        %v740 = vsub.f32 2.0, %v724
        %v741 = vsub.f32 2.0, %v725
        %v742 = vsub.f32 2.0, %v726
        %v743 = vsub.f32 2.0, %v727
        %v744 = vmul.f32 %v696, %v728
        %v745 = vmul.f32 %v697, %v729
        %v746 = vmul.f32 %v698, %v730
        %v747 = vmul.f32 %v699, %v731
        %v748 = vmul.f32 %v700, %v732
        %v749 = vmul.f32 %v701, %v733
        %v750 = vmul.f32 %v702, %v734
        %v751 = vmul.f32 %v703, %v735
        %v752 = vmul.f32 %v704, %v736
        %v753 = vmul.f32 %v705, %v737
        %v754 = vmul.f32 %v706, %v738
        %v755 = vmul.f32 %v707, %v739
        %v756 = vmul.f32 %v708, %v740
        %v757 = vmul.f32 %v709, %v741
        %v758 = vmul.f32 %v710, %v742
        %v759 = vmul.f32 %v711, %v743
        %760 = vmatpush.msra.mxu0 %v498
        %761 = vmatpush.msra.mxu0 %v496
        %762 = vmatpush.msra.mxu0 %v494
        %763 = vmatpush.msra.mxu0 %v492
        %764 = vmatpush.msra.mxu0 %v490
        %765 = vmatpush.msra.mxu0 %v488
        %766 = vmatpush.msra.mxu0 %v486
        %767 = vmatpush.msra.mxu0 %v484
        %768 = vmatpush.msra.mxu0 %v482
        %769 = vmatpush.msra.mxu0 %v480
        %770 = vmatpush.msra.mxu0 %v478
        %771 = vmatpush.msra.mxu0 %v476
        %772 = vmatpush.msra.mxu0 %v474
        %773 = vmatpush.msra.mxu0 %v472
        %774 = vmatpush.msra.mxu0 %v470
        %775 = vmatpush.msra.mxu0 %v468
        %776 = vmatmul.f32.gmra.mxu0 %v648
        %v777 = vpop.f32.mrf.mxu0
        %v778 = vadd.f32 0.0, %v777
        %779 = vmatmul.f32.gmra.mxu0 %v649
        %v780 = vpop.f32.mrf.mxu0
        %v781 = vadd.f32 0.0, %v780
        %782 = vmatmul.f32.gmra.mxu0 %v650
        %v783 = vpop.f32.mrf.mxu0
        %v784 = vadd.f32 0.0, %v783
        %785 = vmatmul.f32.gmra.mxu0 %v651
        %v786 = vpop.f32.mrf.mxu0
        %v787 = vadd.f32 0.0, %v786
        %788 = vmatmul.f32.gmra.mxu0 %v652
        %v789 = vpop.f32.mrf.mxu0
        %v790 = vadd.f32 0.0, %v789
        %791 = vmatmul.f32.gmra.mxu0 %v653
        %v792 = vpop.f32.mrf.mxu0
        %v793 = vadd.f32 0.0, %v792
        %794 = vmatmul.f32.gmra.mxu0 %v654
        %v795 = vpop.f32.mrf.mxu0
        %v796 = vadd.f32 0.0, %v795
        %797 = vmatmul.f32.gmra.mxu0 %v655
        %v798 = vpop.f32.mrf.mxu0
        %v799 = vadd.f32 0.0, %v798
        %800 = vmatmul.f32.gmra.mxu0 %v656
        %v801 = vpop.f32.mrf.mxu0
        %v802 = vadd.f32 0.0, %v801
        %803 = vmatmul.f32.gmra.mxu0 %v657
        %v804 = vpop.f32.mrf.mxu0
        %v805 = vadd.f32 0.0, %v804
        %806 = vmatmul.f32.gmra.mxu0 %v658
        %v807 = vpop.f32.mrf.mxu0
        %v808 = vadd.f32 0.0, %v807
        %809 = vmatmul.f32.gmra.mxu0 %v659
        %v810 = vpop.f32.mrf.mxu0
        %v811 = vadd.f32 0.0, %v810
        %812 = vmatmul.f32.gmra.mxu0 %v660
        %v813 = vpop.f32.mrf.mxu0
        %v814 = vadd.f32 0.0, %v813
        %815 = vmatmul.f32.gmra.mxu0 %v661
        %v816 = vpop.f32.mrf.mxu0
        %v817 = vadd.f32 0.0, %v816
        %818 = vmatmul.f32.gmra.mxu0 %v662
        %v819 = vpop.f32.mrf.mxu0
        %v820 = vadd.f32 0.0, %v819
        %821 = vmatmul.f32.gmra.mxu0 %v663
        %v822 = vpop.f32.mrf.mxu0
        %v823 = vadd.f32 0.0, %v822
        %824 = vdwg.mxu0
        %v825 = vmul.f32 %v778, %v744
        %v826 = vmul.f32 %v781, %v745
        %v827 = vmul.f32 %v784, %v746
        %v828 = vmul.f32 %v787, %v747
        %v829 = vmul.f32 %v790, %v748
        %v830 = vmul.f32 %v793, %v749
        %v831 = vmul.f32 %v796, %v750
        %v832 = vmul.f32 %v799, %v751
        %v833 = vmul.f32 %v802, %v752
        %v834 = vmul.f32 %v805, %v753
        %v835 = vmul.f32 %v808, %v754
        %v836 = vmul.f32 %v811, %v755
        %v837 = vmul.f32 %v814, %v756
        %v838 = vmul.f32 %v817, %v757
        %v839 = vmul.f32 %v820, %v758
        %v840 = vmul.f32 %v823, %v759
        %841 = vst [vmem:[%s244] sm:$0xff] %v825
        %842 = vst [vmem:[%s244 + $0x8] sm:$0xff] %v826
        %843 = vst [vmem:[%s244 + $0x10] sm:$0xff] %v827
        %844 = vst [vmem:[%s244 + $0x18] sm:$0xff] %v828
        %845 = vst [vmem:[%s244 + $0x20] sm:$0xff] %v829
        %846 = vst [vmem:[%s244 + $0x28] sm:$0xff] %v830
        %847 = vst [vmem:[%s244 + $0x30] sm:$0xff] %v831
        %848 = vst [vmem:[%s244 + $0x38] sm:$0xff] %v832
        %849 = vst [vmem:[%s244 + $0x40] sm:$0xff] %v833
        %850 = vst [vmem:[%s244 + $0x48] sm:$0xff] %v834
        %851 = vst [vmem:[%s244 + $0x50] sm:$0xff] %v835
        %852 = vst [vmem:[%s244 + $0x58] sm:$0xff] %v836
        %853 = vst [vmem:[%s244 + $0x60] sm:$0xff] %v837
        %854 = vst [vmem:[%s244 + $0x68] sm:$0xff] %v838
        %855 = vst [vmem:[%s244 + $0x70] sm:$0xff] %v839
        %856 = vst [vmem:[%s244 + $0x78] sm:$0xff] %v840
        %s857 = sand.u32 %s159, 1
        %s858 = scalar_lea.sflag [#allocation3], %s857
        %s859 = sand.u32 %s159, 1
        %s860 = smul.addr %s859, 128
        %s861 = scalar_lea.vmem [#allocation2], %s860
        // Predicated region
        $region45: #{tpu_custom_call.1} parent=43 // pred_check
          %p862 = pneg %p169
        $region46: #{tpu_custom_call.1} parent=43 // pred_check_branch
          %864 = sbr.rel (%p862) target = $region48
        $region47: #{tpu_custom_call.1} parent=43 // pred_region
          %866 = vsyncadd %s858, 0
          %s867 = smul.addr %s20, 16
          %s868 = smul.addr %s867, 8
          %s869 = scalar_lea.hbm %s6, %s868
          %s870 = sshll.u32 %s861, 4
          %s871 = int_to_ptr.vmem [resolvable:$true] %s870
          %s872 = sshll.u32 %s869, 4
          %s873 = int_to_ptr.hbm [resolvable:$true] %s872
          %878 = dma.vmem_to_hbm [thread:$0]  %s871, 2048, %s873, %s858, 128, 128, 8
        $region48: #{tpu_custom_call.1} parent=43 // pred_fallthru
          _
      $region44: #{tpu_custom_call.1} parent=5 // pred_fallthru
        _
      %p879 = scmp.le.s32.totalorder 2, %s15
      // Predicated region
      $region49: #{tpu_custom_call.1} parent=5 // pred_check
        %p880 = pneg %p879
      $region50: #{tpu_custom_call.1} parent=5 // pred_check_branch
        %882 = sbr.rel (%p880) target = $region52
      $region51: #{tpu_custom_call.1} parent=5 // pred_region
        %s883 = ssub.s32 %s15, 2
        // Predicated region
        $region53: #{tpu_custom_call.1} parent=51 // pred_check
          %p884 = pneg %p175
        $region54: #{tpu_custom_call.1} parent=51 // pred_check_branch
          %886 = sbr.rel (%p884) target = $region56
        $region55: #{tpu_custom_call.1} parent=51 // pred_region
          %s887 = sand.u32 %s160, 1
          %s888 = scalar_lea.sflag [#allocation3], %s887
          %s889 = sand.u32 %s160, 1
          %s890 = smul.addr %s889, 128
          %s891 = scalar_lea.vmem [#allocation2], %s890
          %893 = dma.done %s888, 2048
        $region56: #{tpu_custom_call.1} parent=51 // pred_fallthru
          _
      $region52: #{tpu_custom_call.1} parent=5 // pred_fallthru
        _
    $region6: #{tpu_custom_call.1} parent=1 // loop_footer
      %s19 = sadd.s32 1, %s15
    $region7: #{tpu_custom_call.1} parent=1 // loop_footer_branch
      %14 = sbr.rel target = $region3
    $region8: #{tpu_custom_call.1} parent=1 // loop_exit
      _
    %894 = vsyncpa [#allocation3], 1
    %s895 = scalar_lea.sflag [#allocation3], 1
    %896 = vsyncpa %s895, 1

</llo_original>
